<compile_context>
chip_gen: v7x
topology: tpu7x:2x2x1
jax: 0.10.0
libtpu: 0.0.40
codegen_flags: <defaults>
</compile_context>

<pallas_src>
import jax
import jax.numpy as jnp
from jax.experimental import pallas as pl
from jax.experimental.pallas import tpu as pltpu


_LANE = 1024  # lane-dense last dim (multiple of 128) -> full unmasked vst stores


# --------------------------------------------------------------------------- #
# Kernels
# --------------------------------------------------------------------------- #
def _binarize_eval_kernel(x_ref, o_ref):
    # round(sigmoid(x)) with round-half-even == (x > 0) exactly.
    o_ref[...] = jnp.where(x_ref[...] > 0, 1.0, 0.0).astype(o_ref.dtype)


def _binarize_train_kernel(x_ref, n_ref, o_ref):
    x = x_ref[...].astype(jnp.float32)
    # sigmoid(x) == 0.5 * (tanh(0.5 * x) + 1): single transcendental.
    s = 0.5 * (jnp.tanh(0.5 * x) + 1.0)
    n = n_ref[...].astype(jnp.float32)
    o_ref[...] = (s + s * (1.0 - s) * n).astype(o_ref.dtype)


# --------------------------------------------------------------------------- #
# Tiling / wrapper
# --------------------------------------------------------------------------- #
def _pick_block_rows(rows: int, itemsize: int) -> int:
    """~2 MiB blocks for any dtype, multiple of 8, and >= 2 grid steps when possible."""
    target = 512 * max(1, 4 // max(1, itemsize))   # 512 rows f32, 1024 bf16, 2048 int8
    if rows <= 8:
        return rows                                 # full-extent block (allowed)
    bm = max(8, min(target, (rows // 8) * 8))
    if pl.cdiv(rows, bm) < 2:
        # Split so both TensorCores (v7x) get work and pipelining kicks in.
        bm = max(8, (((rows + 1) // 2 + 7) // 8) * 8)
    return bm


def _binarize_2d(x2d, noise2d, training: bool):
    rows, lane = x2d.shape
    bm = _pick_block_rows(rows, jnp.dtype(x2d.dtype).itemsize)
    grid = (pl.cdiv(rows, bm),)
    spec = pl.BlockSpec((bm, lane), lambda i: (i, 0))
    compiler_params = pltpu.CompilerParams(
        dimension_semantics=("parallel",),      # shard rows across TCs on v7x
        vmem_limit_bytes=48 * 1024 * 1024,
    )
    out_shape = jax.ShapeDtypeStruct((rows, lane), x2d.dtype)

    if training:
        return pl.pallas_call(
            _binarize_train_kernel,
            out_shape=out_shape,
            grid=grid,
            in_specs=[spec, spec],
            out_specs=spec,
            compiler_params=compiler_params,
        )(x2d, noise2d)

    return pl.pallas_call(
        _binarize_eval_kernel,
        out_shape=out_shape,
        grid=grid,
        in_specs=[spec],
        out_specs=spec,
        compiler_params=compiler_params,
    )(x2d)


def binarize_forward(x, *, training: bool = False, key=None, lane: int = _LANE):
    """Binarize forward pass.  x: any-shape float array."""
    orig_shape = x.shape
    total = x.size

    noise_flat = None
    if training:
        if key is None:
            key = jax.random.PRNGKey(0)
        noise_flat = jax.random.normal(key, (total,), dtype=x.dtype)

    flat = x.reshape(-1)
    bulk = (total // lane) * lane              # zero-copy kernel-sized portion

    pieces = []
    if bulk > 0:
        x2d = flat[:bulk].reshape(bulk // lane, lane)
        if training:
            n2d = noise_flat[:bulk].reshape(bulk // lane, lane)
            out2d = _binarize_2d(x2d, n2d, True)
        else:
            out2d = _binarize_2d(x2d, None, False)
        pieces.append(out2d.reshape(-1))

    if bulk != total:
        # <lane-element tail: plain jnp (negligible), avoids a padded
        # full-tensor copy + slice (extra HBM read+write of the whole tensor).
        xt = flat[bulk:]
        if training:
            st = jax.nn.sigmoid(xt.astype(jnp.float32))
            nt = noise_flat[bulk:].astype(jnp.float32)
            tail = (st + st * (1.0 - st) * nt).astype(x.dtype)
        else:
            tail = jnp.where(xt > 0, 1.0, 0.0).astype(x.dtype)
        pieces.append(tail)

    out = pieces[0] if len(pieces) == 1 else jnp.concatenate(pieces)
    return out.reshape(orig_shape)


# --------------------------------------------------------------------------- #
# Self-test
# --------------------------------------------------------------------------- #
if __name__ == "__main__":
    key = jax.random.PRNGKey(0)
    kx, kn = jax.random.split(key)

    # Small NCHW input consistent with a conv-style feature map.
    B, C, H, W = 2, 4, 16, 16
    x = jax.random.normal(kx, (B, C, H, W), dtype=jnp.float32)

    # --- Eval path: round(sigmoid(x)) == (x > 0) -- exact check. ---
    out_eval = jax.block_until_ready(binarize_forward(x, training=False))
    ref_eval = jnp.round(jax.nn.sigmoid(x))
    assert out_eval.shape == x.shape and out_eval.dtype == x.dtype
    assert bool(jnp.array_equal(out_eval, ref_eval)), "eval path mismatch"

    # --- Training path: s + s*(1-s)*N(0,1), noise deterministic from key. ---
    out_train = jax.block_until_ready(binarize_forward(x, training=True, key=kn))
    noise = jax.random.normal(kn, (x.size,), dtype=x.dtype).reshape(x.shape)
    s = jax.nn.sigmoid(x)
    ref_train = s + s * (1.0 - s) * noise
    assert out_train.shape == x.shape and out_train.dtype == x.dtype
    assert bool(jnp.all(jnp.isfinite(out_train)))
    assert bool(jnp.allclose(out_train, ref_train, rtol=1e-4, atol=1e-4)), \
        "training path mismatch"

    print("KERNEL_OK")
</pallas_src>

<mosaic_0001>
module attributes {stable_mosaic.version = 11 : i64} {
  func.func @_binarize_eval_kernel(%arg0: i32, %arg1: memref<2x1024xf32, #tpu.memory_space<vmem>>, %arg2: memref<2x1024xf32, #tpu.memory_space<vmem>>) attributes {dimension_semantics = [#tpu.dimension_semantics<parallel>], iteration_bounds = array<i64: 1>, scalar_prefetch = 0 : i64, scratch_operands = 0 : i64, tpu.core_type = #tpu.core_type<tc>, window_params = [{transform_indices = @transform_0, window_bounds = array<i64: 2, 1024>}, {transform_indices = @transform_1, window_bounds = array<i64: 2, 1024>}]} {
    %c0 = arith.constant 0 : index
    %c0_0 = arith.constant 0 : index
    %0 = vector.load %arg1[%c0, %c0_0] : memref<2x1024xf32, #tpu.memory_space<vmem>>, vector<2x1024xf32>
    %cst = arith.constant 0.000000e+00 : f32
    %1 = vector.broadcast %cst : f32 to vector<2x1024xf32>
    %2 = arith.cmpf ogt, %0, %1 : vector<2x1024xf32>
    %cst_1 = arith.constant 1.000000e+00 : f32
    %cst_2 = arith.constant 0.000000e+00 : f32
    %3 = vector.broadcast %cst_1 : f32 to vector<2x1024xf32>
    %4 = vector.broadcast %cst_2 : f32 to vector<2x1024xf32>
    %5 = arith.select %2, %3, %4 : vector<2x1024xi1>, vector<2x1024xf32>
    %c0_3 = arith.constant 0 : index
    %c0_4 = arith.constant 0 : index
    %6 = vector.load %arg2[%c0_3, %c0_4] : memref<2x1024xf32, #tpu.memory_space<vmem>>, vector<2x1024xf32>
    tpu.vector_store %arg2[%c0_3, %c0_4], %5 {strides = array<i32>} : memref<2x1024xf32, #tpu.memory_space<vmem>>, vector<2x1024xf32>,
    return
  }
  func.func @transform_0(%arg0: i32) -> (i32, i32) {
    %c0_i32 = arith.constant 0 : i32
    %c0_i32_0 = arith.constant 0 : i32
    return %arg0, %c0_i32 : i32, i32
  }
  func.func @transform_1(%arg0: i32) -> (i32, i32) {
    %c0_i32 = arith.constant 0 : i32
    %c0_i32_0 = arith.constant 0 : i32
    return %arg0, %c0_i32 : i32, i32
  }
}

</mosaic_0001>

<llo_original>
// kernel: tpu_custom_call.1
$region0: #{tpu_custom_call.1}
  #allocation0 [shape = 'u32[]', space=smem, size = 0x4, offset = 0x4, fixed_abs, tag = 'smem constant byte address 0x4 - core index']
  #allocation1 [shape = 'u32[144,128]{1,0:T(1,128)}', space=vmem, size = 0x12000, scoped, tag = 'internal scratch']
  %s0 = inlined_call_operand.hbm [shape: f32[2,1024], index: 0, kind: input, shape index: {}]
  %s1 = inlined_call_operand.hbm [shape: f32[2,1024], index: 1, kind: output, shape index: {}]
  %s2 = sld [smem:[#allocation0]]
  $region18: #{tpu_custom_call.1} parent=0
    _
  %s4 = ssub.s32 1, %s2
  %s5 = scalar_select 0, %s4, %s2
  $region1: #{tpu_custom_call.1} parent=0
    #allocation2 [shape = 'u8[8192]{0}', space=vmem, size = 0x2000, scoped, tag = 'input window, operand 0, single buffered']
    #allocation3 [shape = 's32[1]{0}', space=sflag, size = 0x4, scoped, tag = 'scoped memory for tpu_custom_call.1']
    #allocation4 [shape = 's32[1]{0}', space=sflag, size = 0x4, scoped, tag = 'scoped memory for tpu_custom_call.1']
    #allocation5 [shape = 'u8[8192]{0}', space=vmem, size = 0x2000, scoped, tag = 'output window, operand 0, single buffered']
    %6 = vsyncpa [#allocation3], 0
    %7 = vsyncpa [#allocation4], 0
    // Predicated region
    $region2: #{tpu_custom_call.1} parent=1 // pred_check
      _
    $region3: #{tpu_custom_call.1} parent=1 // pred_check_branch
      %9 = sbr.rel (0) target = $region5
    $region4: #{tpu_custom_call.1} parent=1 // pred_region
      %s11 = ssub.s32 256, 256
      %12 = vsyncadd [#allocation3], %s11
      %s14 = sshll.u32 [#allocation2], 4
      %s15 = int_to_ptr.vmem [resolvable:$true] %s14
      %17 = dma.hbm_to_vmem [thread:$0]  %s0, 256, %s15, [#allocation3]
    $region5: #{tpu_custom_call.1} parent=1 // pred_fallthru
      _
    // Predicated region
    $region6: #{tpu_custom_call.1} parent=1 // pred_check
      _
    $region7: #{tpu_custom_call.1} parent=1 // pred_check_branch
      %19 = sbr.rel (0) target = $region9
    $region8: #{tpu_custom_call.1} parent=1 // pred_region
      %20 = dma.done [#allocation3], 256
    $region9: #{tpu_custom_call.1} parent=1 // pred_fallthru
      _
    %v21 = vld [vmem:[#allocation2] sm:$0xff]
    %v22 = vld [vmem:[#allocation2 + $0x8] sm:$0xff]
    %vm23 = vcmp.gt.f32.partialorder %v21, 0.0
    %vm24 = vcmp.gt.f32.partialorder %v22, 0.0
    %v25 = vsel %vm23, 1.0, 0.0
    %v26 = vsel %vm24, 1.0, 0.0
    %27 = vst [vmem:[#allocation5] sm:$0xff] %v25
    %28 = vst [vmem:[#allocation5 + $0x8] sm:$0xff] %v26
    // Predicated region
    $region10: #{tpu_custom_call.1} parent=1 // pred_check
      _
    $region11: #{tpu_custom_call.1} parent=1 // pred_check_branch
      %30 = sbr.rel (0) target = $region13
    $region12: #{tpu_custom_call.1} parent=1 // pred_region
      %s32 = ssub.s32 256, 256
      %33 = vsyncadd [#allocation4], %s32
      %s35 = sshll.u32 [#allocation5], 4
      %s36 = int_to_ptr.vmem [resolvable:$true] %s35
      %38 = dma.vmem_to_hbm [thread:$0]  %s36, 256, %s1, [#allocation4]
    $region13: #{tpu_custom_call.1} parent=1 // pred_fallthru
      _
    // Predicated region
    $region14: #{tpu_custom_call.1} parent=1 // pred_check
      _
    $region15: #{tpu_custom_call.1} parent=1 // pred_check_branch
      %40 = sbr.rel (0) target = $region17
    $region16: #{tpu_custom_call.1} parent=1 // pred_region
      %41 = dma.done [#allocation4], 256
    $region17: #{tpu_custom_call.1} parent=1 // pred_fallthru
      _
    %42 = vsyncpa [#allocation3], 1
    %43 = vsyncpa [#allocation4], 1

</llo_original>
